<compile_context>
chip_gen: v6e
topology: v6e:2x2x1
jax: 0.10.0
libtpu: 0.0.40
codegen_flags: <defaults>
</compile_context>

<pallas_src>
import functools
import math

import jax
import jax.numpy as jnp
from jax.experimental import pallas as pl
from jax.experimental.pallas import tpu as pltpu

LANE = 128
SUBLANE = 8

# Keep the dense `g` operand fully resident in VMEM when its (double-buffered)
# footprint stays under this budget; otherwise stream K tiles from HBM.
_RESIDENT_G_BUDGET = 12 << 20
# Fuse the next layer's linear into the adj-matmul epilogue only when its
# (double-buffered) resident W/b footprint stays under this budget.
_FUSE_W_BUDGET = 8 << 20


def _round_up(v, m):
    return ((v + m - 1) // m) * m


def _pad2d(a, rows, cols, dtype):
    a = jnp.asarray(a, dtype)
    if a.shape == (rows, cols):
        return a
    return jnp.zeros((rows, cols), dtype).at[: a.shape[0], : a.shape[1]].set(a)


def _compiler_params(dim_sems, need_bytes):
    # Explicit scoped-VMEM limit: what the pipeline needs + headroom, clamped so
    # it stays safe on v7x (64 MiB physical VMEM) while raising v5e's 16 MiB default.
    limit = int(min(max(need_bytes + (8 << 20), 32 << 20), 48 << 20))
    return pltpu.CompilerParams(dimension_semantics=dim_sems, vmem_limit_bytes=limit)


# --------------------------------------------------------------------------- #
# Kernel 1: row-tiled linear  g = x @ W + b   (bf16 inputs, f32 accumulation)
# Used for the first layer, and as a fallback when the fused epilogue would not fit.
# --------------------------------------------------------------------------- #
def _linear_kernel(x_ref, w_ref, b_ref, g_ref):
    acc = jnp.dot(x_ref[...], w_ref[...], preferred_element_type=jnp.float32)
    g_ref[...] = (acc + b_ref[...]).astype(g_ref.dtype)


def _linear(h_bf16, w_bf16, b_f32, tile_m):
    n_pad, din = h_bf16.shape
    dout = w_bf16.shape[1]
    need = (
        2 * (tile_m * din * 2)      # h row tiles (double buffered, bf16)
        + 2 * (din * dout * 2)      # resident W (bf16)
        + 2 * (dout * 4)            # resident bias (f32)
        + 2 * (tile_m * dout * 2)   # g row tiles (double buffered, bf16)
    )
    cost = pl.CostEstimate(
        flops=int(2 * n_pad * din * dout),
        transcendentals=0,
        bytes_accessed=int(n_pad * din * 2 + din * dout * 2 + n_pad * dout * 2),
    )
    return pl.pallas_call(
        _linear_kernel,
        out_shape=jax.ShapeDtypeStruct((n_pad, dout), jnp.bfloat16),
        grid_spec=pltpu.PrefetchScalarGridSpec(
            num_scalar_prefetch=0,
            grid=(n_pad // tile_m,),
            in_specs=[
                pl.BlockSpec((tile_m, din), lambda i: (i, 0)),
                pl.BlockSpec((din, dout), lambda i: (0, 0)),   # resident weights
                pl.BlockSpec((1, dout), lambda i: (0, 0)),     # resident bias
            ],
            out_specs=pl.BlockSpec((tile_m, dout), lambda i: (i, 0)),
        ),
        compiler_params=_compiler_params(("parallel",), need),
        cost_estimate=cost,
    )(h_bf16, w_bf16, b_f32)


# --------------------------------------------------------------------------- #
# Kernel 2: dense aggregation with fused epilogue.
#   acc = Adj @ g   (grid = (row tiles, K tiles), f32 accumulator)
#   mode == "fused": out = (relu(acc).bf16 @ W_next + b_next).bf16
#   mode == "relu" : out = relu(acc).bf16
#   mode == "plain": out = acc.f32                 (last GCN layer)
# --------------------------------------------------------------------------- #
def _adj_layer_kernel(mode, g_resident, tile_k, *refs):
    if mode == "fused":
        adj_ref, g_ref, w_ref, b_ref, out_ref, acc_ref = refs
    else:
        adj_ref, g_ref, out_ref, acc_ref = refs

    k = pl.program_id(1)

    @pl.when(k == 0)
    def _():
        acc_ref[...] = jnp.zeros_like(acc_ref)

    if g_resident:
        start = pl.multiple_of(k * tile_k, tile_k)
        g_tile = g_ref[pl.ds(start, tile_k), :]
    else:
        g_tile = g_ref[...]

    acc_ref[...] += jnp.dot(adj_ref[...], g_tile, preferred_element_type=jnp.float32)

    @pl.when(k == pl.num_programs(1) - 1)
    def _():
        h = acc_ref[...]
        if mode == "plain":
            out_ref[...] = h.astype(out_ref.dtype)
        else:
            h = jnp.maximum(h, 0.0).astype(jnp.bfloat16)
            if mode == "fused":
                # Next layer's linear fused into the epilogue: intermediate
                # activations never touch HBM.
                g_next = (
                    jnp.dot(h, w_ref[...], preferred_element_type=jnp.float32)
                    + b_ref[...]
                )
                out_ref[...] = g_next.astype(out_ref.dtype)
            else:  # "relu"
                out_ref[...] = h.astype(out_ref.dtype)


def _adj_layer(adj_bf16, g_bf16, w_next, b_next, tile_m, tile_k, mode,
               resident_g_budget):
    n_pad = adj_bf16.shape[0]
    dg = g_bf16.shape[1]
    fused = mode == "fused"
    dout = w_next.shape[1] if fused else dg
    out_dtype = jnp.float32 if mode == "plain" else jnp.bfloat16
    out_itemsize = jnp.dtype(out_dtype).itemsize

    grid = (n_pad // tile_m, n_pad // tile_k)
    g_resident = 2 * n_pad * dg * 2 <= resident_g_budget

    if g_resident:
        g_spec = pl.BlockSpec((n_pad, dg), lambda i, k: (0, 0))   # fetched once
        g_vmem = 2 * n_pad * dg * 2
        g_hbm_reads = n_pad * dg * 2
    else:
        g_spec = pl.BlockSpec((tile_k, dg), lambda i, k: (k, 0))  # streamed per K tile
        g_vmem = 2 * tile_k * dg * 2
        g_hbm_reads = grid[0] * n_pad * dg * 2

    in_specs = [pl.BlockSpec((tile_m, tile_k), lambda i, k: (i, k)), g_spec]
    operands = [adj_bf16, g_bf16]
    flops = 2 * n_pad * n_pad * dg
    w_bytes = 0
    if fused:
        in_specs += [
            pl.BlockSpec((dg, dout), lambda i, k: (0, 0)),   # resident next-layer W
            pl.BlockSpec((1, dout), lambda i, k: (0, 0)),    # resident next-layer b
        ]
        operands += [w_next, b_next]
        flops += 2 * n_pad * dg * dout
        w_bytes = dg * dout * 2 + dout * 4

    need = (
        2 * (tile_m * tile_k * 2)            # Adj tiles (double buffered, bf16)
        + g_vmem                             # g (resident or streamed)
        + 2 * w_bytes                        # resident W/b (if fused)
        + 2 * (tile_m * dout * out_itemsize) # output tiles
        + tile_m * dg * 4                    # f32 accumulator scratch
    )
    cost = pl.CostEstimate(
        flops=int(flops),
        transcendentals=0,
        bytes_accessed=int(
            n_pad * n_pad * 2 + g_hbm_reads + w_bytes + n_pad * dout * out_itemsize
        ),
    )
    return pl.pallas_call(
        functools.partial(_adj_layer_kernel, mode, g_resident, tile_k),
        out_shape=jax.ShapeDtypeStruct((n_pad, dout), out_dtype),
        grid_spec=pltpu.PrefetchScalarGridSpec(
            num_scalar_prefetch=0,
            grid=grid,
            in_specs=in_specs,
            out_specs=pl.BlockSpec((tile_m, dout), lambda i, k: (i, 0)),
            scratch_shapes=[pltpu.VMEM((tile_m, dg), jnp.float32)],
        ),
        compiler_params=_compiler_params(("parallel", "arbitrary"), need),
        cost_estimate=cost,
    )(*operands)


# --------------------------------------------------------------------------- #
# Wrapper
# --------------------------------------------------------------------------- #
def gcn_forward(x, adj, gnn_params, *, tile_m=512, tile_k=512,
                resident_g_budget=_RESIDENT_G_BUDGET,
                fuse_next_budget=_FUSE_W_BUDGET):
    """GCN (dense branch) forward.

    gnn_params: list of (W [din, dout], b [dout]) — one per GCNConv_dense layer
                (W already stored input-major, i.e. torch Linear weight transposed).
    Returns the final node representations [N, out_dim].
    """
    assert tile_m % SUBLANE == 0 and tile_k % LANE == 0
    n, in_dim = x.shape
    nlayers = len(gnn_params)
    dims = [in_dim] + [w.shape[1] for w, _ in gnn_params]
    dpad = [_round_up(max(d, 1), LANE) for d in dims]

    # Clamp tiles to the (lane-rounded) problem size; pad N so the grid divides.
    tm = min(tile_m, _round_up(n, LANE))
    tk = min(tile_k, _round_up(n, LANE))
    n_pad = _round_up(n, math.lcm(tm, tk))

    # Pad/cast once; everything the MXU touches is bf16 (f32 accumulation in-kernel).
    h = _pad2d(x, n_pad, dpad[0], jnp.bfloat16)
    adj_bf16 = _pad2d(adj, n_pad, n_pad, jnp.bfloat16)
    w_pad = [
        _pad2d(w, dpad[l], dpad[l + 1], jnp.bfloat16)
        for l, (w, _) in enumerate(gnn_params)
    ]
    b_pad = [
        _pad2d(jnp.reshape(b, (1, -1)), 1, dpad[l + 1], jnp.float32)
        for l, (_, b) in enumerate(gnn_params)
    ]

    # TODO(synk): nn.Dropout(dropout_adj) and F.dropout are training-mode only;
    # at inference they are the identity, which is what we implement here.
    g = _linear(h, w_pad[0], b_pad[0], tm)  # bf16 [n_pad, dpad[1]]
    for l in range(nlayers):
        last = l == nlayers - 1
        if last:
            g = _adj_layer(adj_bf16, g, None, None, tm, tk, "plain",
                           resident_g_budget)
        else:
            w_next, b_next = w_pad[l + 1], b_pad[l + 1]
            fuse = 2 * (dpad[l + 1] * dpad[l + 2] * 2 + dpad[l + 2] * 4) <= fuse_next_budget
            if fuse:
                g = _adj_layer(adj_bf16, g, w_next, b_next, tm, tk, "fused",
                               resident_g_budget)
            else:
                h_mid = _adj_layer(adj_bf16, g, None, None, tm, tk, "relu",
                                   resident_g_budget)
                g = _linear(h_mid, w_next, b_next, tm)

    return g[:n, : dims[-1]]


# --------------------------------------------------------------------------- #
# Pure-JAX reference mirroring the kernel math (bf16 MXU inputs, f32 accum)
# --------------------------------------------------------------------------- #
def _reference_forward(x, adj, gnn_params):
    h = x
    adj_bf = adj.astype(jnp.bfloat16)
    nlayers = len(gnn_params)
    for l, (w, b) in enumerate(gnn_params):
        g = (
            jnp.dot(
                h.astype(jnp.bfloat16),
                w.astype(jnp.bfloat16),
                preferred_element_type=jnp.float32,
            )
            + b
        ).astype(jnp.bfloat16)
        h = jnp.dot(adj_bf, g, preferred_element_type=jnp.float32)
        if l < nlayers - 1:
            h = jnp.maximum(h, 0.0)
    return h


def _init_linear(key, din, dout):
    # Deterministic stand-in for nn.Linear init: U(-1/sqrt(din), 1/sqrt(din)).
    kw, kb = jax.random.split(key)
    bound = 1.0 / jnp.sqrt(jnp.float32(din))
    w = jax.random.uniform(kw, (din, dout), jnp.float32, -bound, bound)
    b = jax.random.uniform(kb, (dout,), jnp.float32, -bound, bound)
    return w, b


if __name__ == "__main__":
    # Small synthetic config consistent with GCN(num_layers=3, sparse=False).
    nlayers = 3
    N = 200            # exercises N padding (-> 256) and a (2, 2) grid at tile=128
    in_dim = 48
    hidden_dim = 32
    out_dim = 16

    key = jax.random.PRNGKey(0)
    kx, kadj, *kparams = jax.random.split(key, 2 + nlayers)

    x = jax.random.normal(kx, (N, in_dim), jnp.float32)
    # Symmetric, row-normalized dense adjacency (dense SUBLIME branch).
    a_raw = jax.random.uniform(kadj, (N, N), jnp.float32)
    a_sym = 0.5 * (a_raw + a_raw.T) + jnp.eye(N, dtype=jnp.float32)
    adj = a_sym / jnp.sum(a_sym, axis=-1, keepdims=True)

    dims = [in_dim] + [hidden_dim] * (nlayers - 1) + [out_dim]
    gnn_params = [
        _init_linear(kparams[l], dims[l], dims[l + 1]) for l in range(nlayers)
    ]

    ref = _reference_forward(x, adj, gnn_params)

    # Fast path: resident g + fused next-layer linear in the adj epilogue.
    out = gcn_forward(x, adj, gnn_params, tile_m=128, tile_k=128)
    jax.block_until_ready(out)
    assert out.shape == (N, out_dim)
    assert jnp.allclose(out, ref, atol=2e-3, rtol=2e-3), float(
        jnp.max(jnp.abs(out - ref))
    )

    # Fallback path: streamed g tiles + separate per-layer linear kernel.
    out_fb = gcn_forward(
        x, adj, gnn_params, tile_m=128, tile_k=128,
        resident_g_budget=0, fuse_next_budget=0,
    )
    jax.block_until_ready(out_fb)
    assert jnp.allclose(out_fb, ref, atol=2e-3, rtol=2e-3), float(
        jnp.max(jnp.abs(out_fb - ref))
    )

    print("KERNEL_OK")
</pallas_src>

<mosaic_0001>
module attributes {stable_mosaic.version = 11 : i64} {
  func.func @_linear_kernel(%arg0: i32, %arg1: memref<128x128xbf16, #tpu.memory_space<vmem>>, %arg2: memref<128x128xbf16, #tpu.memory_space<vmem>>, %arg3: memref<1x128xf32, #tpu.memory_space<vmem>>, %arg4: memref<128x128xbf16, #tpu.memory_space<vmem>>) attributes {dimension_semantics = [#tpu.dimension_semantics<parallel>], iteration_bounds = array<i64: 2>, scalar_prefetch = 0 : i64, scratch_operands = 0 : i64, tpu.core_type = #tpu.core_type<tc>, window_params = [{transform_indices = @transform_0, window_bounds = array<i64: 128, 128>}, {pipeline_mode = #tpu.pipeline_mode<synchronous>, transform_indices = @transform_1, window_bounds = array<i64: 128, 128>}, {pipeline_mode = #tpu.pipeline_mode<synchronous>, transform_indices = @transform_2, window_bounds = array<i64: 1, 128>}, {transform_indices = @transform_3, window_bounds = array<i64: 128, 128>}]} {
    %c0 = arith.constant 0 : index
    %c0_0 = arith.constant 0 : index
    %0 = vector.load %arg1[%c0, %c0_0] : memref<128x128xbf16, #tpu.memory_space<vmem>>, vector<128x128xbf16>
    %c0_1 = arith.constant 0 : index
    %c0_2 = arith.constant 0 : index
    %1 = vector.load %arg2[%c0_1, %c0_2] : memref<128x128xbf16, #tpu.memory_space<vmem>>, vector<128x128xbf16>
    %cst = arith.constant dense<0.000000e+00> : vector<128x128xf32>
    %2 = tpu.matmul %0, %1, %cst {dimension_numbers = #tpu.dot_dimension_numbers<[1], [0], [0], [1], [0, 0, 1, 1], [], []>} : vector<128x128xbf16>, vector<128x128xbf16>, vector<128x128xf32> -> vector<128x128xf32>
    %c0_3 = arith.constant 0 : index
    %c0_4 = arith.constant 0 : index
    %3 = vector.load %arg3[%c0_3, %c0_4] : memref<1x128xf32, #tpu.memory_space<vmem>>, vector<1x128xf32>
    %4 = vector.broadcast %3 : vector<1x128xf32> to vector<128x128xf32>
    %5 = arith.addf %2, %4 : vector<128x128xf32>
    %6 = arith.truncf %5 : vector<128x128xf32> to vector<128x128xbf16>
    %c0_5 = arith.constant 0 : index
    %c0_6 = arith.constant 0 : index
    %7 = vector.load %arg4[%c0_5, %c0_6] : memref<128x128xbf16, #tpu.memory_space<vmem>>, vector<128x128xbf16>
    tpu.vector_store %arg4[%c0_5, %c0_6], %6 {strides = array<i32>} : memref<128x128xbf16, #tpu.memory_space<vmem>>, vector<128x128xbf16>,
    return
  }
  func.func @transform_0(%arg0: i32) -> (i32, i32) {
    %c0_i32 = arith.constant 0 : i32
    %c0_i32_0 = arith.constant 0 : i32
    return %arg0, %c0_i32 : i32, i32
  }
  func.func @transform_1(%arg0: i32) -> (i32, i32) {
    %c0_i32 = arith.constant 0 : i32
    %c0_i32_0 = arith.constant 0 : i32
    %c0_i32_1 = arith.constant 0 : i32
    return %c0_i32, %c0_i32_0 : i32, i32
  }
  func.func @transform_2(%arg0: i32) -> (i32, i32) {
    %c0_i32 = arith.constant 0 : i32
    %c0_i32_0 = arith.constant 0 : i32
    %c0_i32_1 = arith.constant 0 : i32
    return %c0_i32, %c0_i32_0 : i32, i32
  }
  func.func @transform_3(%arg0: i32) -> (i32, i32) {
    %c0_i32 = arith.constant 0 : i32
    %c0_i32_0 = arith.constant 0 : i32
    return %arg0, %c0_i32 : i32, i32
  }
}

</mosaic_0001>

<llo_original>
// kernel: tpu_custom_call.1
$region0: #{tpu_custom_call.1}
  #allocation0 [shape = 'u32[]', space=smem, size = 0x4, offset = 0x4, fixed_abs, tag = 'smem constant byte address 0x4 - core index']
  #allocation1 [shape = 'u32[144,128]{1,0:T(1,128)}', space=vmem, size = 0x12000, scoped, tag = 'internal scratch']
  %s0 = inlined_call_operand.hbm [shape: bf16[256,128], index: 0, kind: input, shape index: {}]
  %s1 = inlined_call_operand.hbm [shape: bf16[128,128], index: 1, kind: input, shape index: {}]
  %s2 = inlined_call_operand.vmem [shape: f32[1,128], index: 2, kind: input, shape index: {}]
  %s3 = inlined_call_operand.hbm [shape: bf16[256,128], index: 3, kind: output, shape index: {}]
  %s4 = sld [smem:[#allocation0]]
  $region53: #{tpu_custom_call.1} parent=0
    _
  %s6 = ssub.s32 1, %s4
  %s7 = scalar_select 0, %s6, %s4
  $region1: #{tpu_custom_call.1} parent=0
    #allocation2 [shape = 'u8[65536]{0}', space=vmem, size = 0x10000, scoped, tag = 'input window, operand 0']
    #allocation3 [shape = 's32[2]{0}', space=sflag, size = 0x8, scoped, tag = 'scoped memory for tpu_custom_call.1']
    #allocation4 [shape = 's32[2]{0}', space=sflag, size = 0x8, scoped, tag = 'scoped memory for tpu_custom_call.1']
    #allocation5 [shape = 'u8[32768]{0}', space=vmem, size = 0x8000, scoped, tag = 'input window, operand 1, single buffered']
    #allocation6 [shape = 's32[1]{0}', space=sflag, size = 0x4, scoped, tag = 'scoped memory for tpu_custom_call.1']
    #allocation7 [shape = 'u8[65536]{0}', space=vmem, size = 0x10000, scoped, tag = 'output window, operand 0']
    %8 = vsyncpa [#allocation3], 0
    %s9 = scalar_lea.sflag [#allocation3], 1
    %10 = vsyncpa %s9, 0
    %11 = vsyncpa [#allocation6], 0
    %12 = vsyncpa [#allocation4], 0
    %s13 = scalar_lea.sflag [#allocation4], 1
    %14 = vsyncpa %s13, 0
    loop: start=0, step=1, limit=4
    $region2: #{tpu_custom_call.1} parent=1 // loop_pre_header
      _
    $region3: #{tpu_custom_call.1} parent=1 // loop_header
      %s16 = sphi 0, %s20
      %p17 = scmp.ge.s32.totalorder %s16, 4
      %s26 = sphi 0, %s28
      %s29 = sphi 0, %s26
      %s30 = sphi 0, %s29
      %s46 = sphi 0, %s30
      %s50 = sphi 0, %s50
      %s52 = sphi 0, %s50
      %s53 = sphi 0, %s52
      %s67 = sphi 0, %s53
      %s71 = sphi 0, %s71
      %s73 = sphi 0, %s71
      %s74 = sphi 0, %s73
      %s88 = sphi 0, %s74
      %s94 = sphi 0, %s96
      %s97 = sphi 0, %s94
      %s98 = sphi 0, %s97
      %s114 = sphi 0, %s98
    $region4: #{tpu_custom_call.1} parent=1 // loop_header_branch
      %19 = sbr.rel (%p17) target = $region8
    $region5: #{tpu_custom_call.1} parent=1 // loop_body
      %s21 = ssub.s32 %s16, 1
      %s22 = ssub.s32 %s16, 2
      %s23 = sadd.s32 %s16, 1
      %s24 = ssub.s32 %s16, %s23
      %p25 = scmp.eq.s32.totalorder %s24, 0
      %s27 = sadd.s32 %s26, 1
      %s28 = scalar_select %p25, %s26, %s27
      %p31 = pneg %p25
      %p32 = scmp.eq.s32.totalorder %s16, 1
      %p33 = por %p31, %p32
      %p34 = scmp.ne.s32.totalorder %s26, %s29
      %p35 = scmp.eq.s32.totalorder %s16, 0
      %p36 = por %p34, %p35
      %p37 = scmp.ne.s32.totalorder %s26, %s29
      %p38 = scmp.eq.s32.totalorder %s21, 1
      %p39 = por %p37, %p38
      %p40 = scmp.ne.s32.totalorder %s29, %s30
      %p41 = scmp.eq.s32.totalorder %s21, 0
      %p42 = por %p40, %p41
      %p43 = scmp.ne.s32.totalorder %s29, %s30
      %p44 = scmp.eq.s32.totalorder %s22, 1
      %p45 = por %p43, %p44
      %p47 = scmp.ne.s32.totalorder %s30, %s46
      %p48 = scmp.eq.s32.totalorder %s22, 0
      %p49 = por %p47, %p48
      %s51 = sadd.s32 %s50, 1
      %p54 = scmp.eq.s32.totalorder %s16, 1
      %p55 = scmp.ne.s32.totalorder %s50, %s52
      %p56 = scmp.eq.s32.totalorder %s16, 0
      %p57 = por %p55, %p56
      %p58 = scmp.ne.s32.totalorder %s50, %s52
      %p59 = scmp.eq.s32.totalorder %s21, 1
      %p60 = por %p58, %p59
      %p61 = scmp.ne.s32.totalorder %s52, %s53
      %p62 = scmp.eq.s32.totalorder %s21, 0
      %p63 = por %p61, %p62
      %p64 = scmp.ne.s32.totalorder %s52, %s53
      %p65 = scmp.eq.s32.totalorder %s22, 1
      %p66 = por %p64, %p65
      %p68 = scmp.ne.s32.totalorder %s53, %s67
      %p69 = scmp.eq.s32.totalorder %s22, 0
      %p70 = por %p68, %p69
      %s72 = sadd.s32 %s71, 1
      %p75 = scmp.eq.s32.totalorder %s16, 1
      %p76 = scmp.ne.s32.totalorder %s71, %s73
      %p77 = scmp.eq.s32.totalorder %s16, 0
      %p78 = por %p76, %p77
      %p79 = scmp.ne.s32.totalorder %s71, %s73
      %p80 = scmp.eq.s32.totalorder %s21, 1
      %p81 = por %p79, %p80
      %p82 = scmp.ne.s32.totalorder %s73, %s74
      %p83 = scmp.eq.s32.totalorder %s21, 0
      %p84 = por %p82, %p83
      %p85 = scmp.ne.s32.totalorder %s73, %s74
      %p86 = scmp.eq.s32.totalorder %s22, 1
      %p87 = por %p85, %p86
      %p89 = scmp.ne.s32.totalorder %s74, %s88
      %p90 = scmp.eq.s32.totalorder %s22, 0
      %p91 = por %p89, %p90
      %s92 = ssub.s32 %s16, %s23
      %p93 = scmp.eq.s32.totalorder %s92, 0
      %s95 = sadd.s32 %s94, 1
      %s96 = scalar_select %p93, %s94, %s95
      %p99 = pneg %p93
      %p100 = scmp.eq.s32.totalorder %s16, 1
      %p101 = por %p99, %p100
      %p102 = scmp.ne.s32.totalorder %s94, %s97
      %p103 = scmp.eq.s32.totalorder %s16, 0
      %p104 = por %p102, %p103
      %p105 = scmp.ne.s32.totalorder %s94, %s97
      %p106 = scmp.eq.s32.totalorder %s21, 1
      %p107 = por %p105, %p106
      %p108 = scmp.ne.s32.totalorder %s97, %s98
      %p109 = scmp.eq.s32.totalorder %s21, 0
      %p110 = por %p108, %p109
      %p111 = scmp.ne.s32.totalorder %s97, %s98
      %p112 = scmp.eq.s32.totalorder %s22, 1
      %p113 = por %p111, %p112
      %p115 = scmp.ne.s32.totalorder %s98, %s114
      %p116 = scmp.eq.s32.totalorder %s22, 0
      %p117 = por %p115, %p116
      %p118 = scmp.le.s32.totalorder 1, %s16
      %p119 = scmp.lt.s32.totalorder %s16, 3
      %p120 = pnand %p118, %p119
      %p121 = pneg %p120
      // Predicated region
      $region9: #{tpu_custom_call.1} parent=5 // pred_check
        _
      $region10: #{tpu_custom_call.1} parent=5 // pred_check_branch
        %123 = sbr.rel (%p120) target = $region12
      $region11: #{tpu_custom_call.1} parent=5 // pred_region
        %s124 = ssub.s32 %s16, 1
        // Predicated region
        $region13: #{tpu_custom_call.1} parent=11 // pred_check
          %p125 = pneg %p63
        $region14: #{tpu_custom_call.1} parent=11 // pred_check_branch
          %127 = sbr.rel (%p125) target = $region16
        $region15: #{tpu_custom_call.1} parent=11 // pred_region
          %s129 = ssub.s32 1024, 1024
          %130 = vsyncadd [#allocation6], %s129
          %s131 = sshll.u32 [#allocation5], 4
          %s132 = int_to_ptr.vmem [resolvable:$true] %s131
          %137 = dma.hbm_to_vmem [thread:$0]  %s1, 1024, %s132, [#allocation6], 64, 64, 4
        $region16: #{tpu_custom_call.1} parent=11 // pred_fallthru
          _
        // Predicated region
        $region17: #{tpu_custom_call.1} parent=11 // pred_check
          %p138 = pneg %p84
        $region18: #{tpu_custom_call.1} parent=11 // pred_check_branch
          %140 = sbr.rel (%p138) target = $region20
        $region19: #{tpu_custom_call.1} parent=11 // pred_region
          _
        $region20: #{tpu_custom_call.1} parent=11 // pred_fallthru
          _
      $region12: #{tpu_custom_call.1} parent=5 // pred_fallthru
        _
      %p141 = scmp.lt.s32.totalorder %s16, 2
      // Predicated region
      $region21: #{tpu_custom_call.1} parent=5 // pred_check
        %p142 = pneg %p141
      $region22: #{tpu_custom_call.1} parent=5 // pred_check_branch
        %144 = sbr.rel (%p142) target = $region24
      $region23: #{tpu_custom_call.1} parent=5 // pred_region
        // Predicated region
        $region25: #{tpu_custom_call.1} parent=23 // pred_check
          %p145 = pneg %p36
        $region26: #{tpu_custom_call.1} parent=23 // pred_check_branch
          %147 = sbr.rel (%p145) target = $region28
        $region27: #{tpu_custom_call.1} parent=23 // pred_region
          %s148 = sand.u32 %s26, 1
          %s149 = scalar_lea.sflag [#allocation3], %s148
          %s150 = sand.u32 %s26, 1
          %s151 = smul.addr %s150, 64
          %s152 = scalar_lea.vmem [#allocation2], %s151
          %s153 = smul.u32 16, %s16
          %s155 = ssub.s32 1024, 1024
          %156 = vsyncadd %s149, %s155
          %s157 = smul.addr %s153, 64
          %s158 = scalar_lea.hbm %s0, %s157
          %s159 = sshll.u32 %s152, 4
          %s160 = int_to_ptr.vmem [resolvable:$true] %s159
          %165 = dma.hbm_to_vmem [thread:$0]  %s158, 1024, %s160, %s149, 64, 64, 4
        $region28: #{tpu_custom_call.1} parent=23 // pred_fallthru
          _
      $region24: #{tpu_custom_call.1} parent=5 // pred_fallthru
        _
      %p166 = scmp.le.s32.totalorder 1, %s16
      %p167 = scmp.lt.s32.totalorder %s16, 3
      %p168 = pnand %p166, %p167
      %p169 = pneg %p168
      // Predicated region
      $region29: #{tpu_custom_call.1} parent=5 // pred_check
        _
      $region30: #{tpu_custom_call.1} parent=5 // pred_check_branch
        %171 = sbr.rel (%p168) target = $region32
      $region31: #{tpu_custom_call.1} parent=5 // pred_region
        %s172 = ssub.s32 %s16, 1
        %s173 = sand.u32 %s29, 1
        %s174 = scalar_lea.sflag [#allocation3], %s173
        %s175 = sand.u32 %s29, 1
        %s176 = smul.addr %s175, 64
        %s177 = scalar_lea.vmem [#allocation2], %s176
        // Predicated region
        $region33: #{tpu_custom_call.1} parent=31 // pred_check
          %p178 = pneg %p42
        $region34: #{tpu_custom_call.1} parent=31 // pred_check_branch
          %180 = sbr.rel (%p178) target = $region36
        $region35: #{tpu_custom_call.1} parent=31 // pred_region
          %181 = dma.done %s174, 1024
        $region36: #{tpu_custom_call.1} parent=31 // pred_fallthru
          _
        // Predicated region
        $region37: #{tpu_custom_call.1} parent=31 // pred_check
          %p182 = pneg %p63
        $region38: #{tpu_custom_call.1} parent=31 // pred_check_branch
          %184 = sbr.rel (%p182) target = $region40
        $region39: #{tpu_custom_call.1} parent=31 // pred_region
          %185 = dma.done [#allocation6], 1024
        $region40: #{tpu_custom_call.1} parent=31 // pred_fallthru
          _
        %s186 = sand.u32 %s29, 1
        %s187 = scalar_lea.sflag [#allocation3], %s186
        %s188 = sand.u32 %s29, 1
        %s189 = smul.addr %s188, 64
        %s190 = scalar_lea.vmem [#allocation2], %s189
        %p191 = pneg %p42
        %p192 = pneg %p39
        %p193 = pneg %p63
        %p194 = pneg %p60
        %p195 = pneg %p84
        %p196 = pneg %p81
        %p197 = pneg %p110
        %p198 = pneg %p107
        %s199 = sand.u32 %s97, 1
        %s200 = scalar_lea.sflag [#allocation4], %s199
        %s201 = sand.u32 %s97, 1
        %s202 = smul.addr %s201, 64
        %s203 = scalar_lea.vmem [#allocation7], %s202
        %s204 = smul.u32 16, %s21
        %s205 = smul.u32 16, %s21
        %v207 = vld [vmem:[%s177] sm:$0xf]
        %v208 = vld [vmem:[%s177 + $0x4] sm:$0xf]
        %v209 = vld [vmem:[%s177 + $0x8] sm:$0xf]
        %v210 = vld [vmem:[%s177 + $0xc] sm:$0xf]
        %v211 = vld [vmem:[%s177 + $0x10] sm:$0xf]
        %v212 = vld [vmem:[%s177 + $0x14] sm:$0xf]
        %v213 = vld [vmem:[%s177 + $0x18] sm:$0xf]
        %v214 = vld [vmem:[%s177 + $0x1c] sm:$0xf]
        %v215 = vld [vmem:[%s177 + $0x20] sm:$0xf]
        %v216 = vld [vmem:[%s177 + $0x24] sm:$0xf]
        %v217 = vld [vmem:[%s177 + $0x28] sm:$0xf]
        %v218 = vld [vmem:[%s177 + $0x2c] sm:$0xf]
        %v219 = vld [vmem:[%s177 + $0x30] sm:$0xf]
        %v220 = vld [vmem:[%s177 + $0x34] sm:$0xf]
        %v221 = vld [vmem:[%s177 + $0x38] sm:$0xf]
        %v222 = vld [vmem:[%s177 + $0x3c] sm:$0xf]
        %v223 = vld [vmem:[#allocation5] sm:$0xf]
        %v224 = vld [vmem:[#allocation5 + $0x4] sm:$0xf]
        %v225 = vld [vmem:[#allocation5 + $0x8] sm:$0xf]
        %v226 = vld [vmem:[#allocation5 + $0xc] sm:$0xf]
        %v227 = vld [vmem:[#allocation5 + $0x10] sm:$0xf]
        %v228 = vld [vmem:[#allocation5 + $0x14] sm:$0xf]
        %v229 = vld [vmem:[#allocation5 + $0x18] sm:$0xf]
        %v230 = vld [vmem:[#allocation5 + $0x1c] sm:$0xf]
        %v231 = vld [vmem:[#allocation5 + $0x20] sm:$0xf]
        %v232 = vld [vmem:[#allocation5 + $0x24] sm:$0xf]
        %v233 = vld [vmem:[#allocation5 + $0x28] sm:$0xf]
        %v234 = vld [vmem:[#allocation5 + $0x2c] sm:$0xf]
        %v235 = vld [vmem:[#allocation5 + $0x30] sm:$0xf]
        %v236 = vld [vmem:[#allocation5 + $0x34] sm:$0xf]
        %v237 = vld [vmem:[#allocation5 + $0x38] sm:$0xf]
        %v238 = vld [vmem:[#allocation5 + $0x3c] sm:$0xf]
        %v239 = vld [vmem:[%s2] sm:$0x1]
        %v241 = vlaneseq
        %v242 = vshrl.u32 %v241, 7
        %v243 = vsub.s32 0, %v242
        %v244 = vrot.slane %v239, %v243
        %v262 = vunpack.c.l.b16 %v207
        %v263 = vunpack.c.l.b16 %v208
        %v264 = vunpack.c.l.b16 %v209
        %v265 = vunpack.c.l.b16 %v210
        %v266 = vunpack.c.l.b16 %v211
        %v267 = vunpack.c.l.b16 %v212
        %v268 = vunpack.c.l.b16 %v213
        %v269 = vunpack.c.l.b16 %v214
        %v270 = vunpack.c.l.b16 %v215
        %v271 = vunpack.c.l.b16 %v216
        %v272 = vunpack.c.l.b16 %v217
        %v273 = vunpack.c.l.b16 %v218
        %v274 = vunpack.c.l.b16 %v219
        %v275 = vunpack.c.l.b16 %v220
        %v276 = vunpack.c.l.b16 %v221
        %v277 = vunpack.c.l.b16 %v222
        %v278 = vpack.c.b16 %v263, %v262
        %v279 = vpack.c.b16 %v265, %v264
        %v280 = vpack.c.b16 %v267, %v266
        %v281 = vpack.c.b16 %v269, %v268
        %v282 = vpack.c.b16 %v271, %v270
        %v283 = vpack.c.b16 %v273, %v272
        %v284 = vpack.c.b16 %v275, %v274
        %v285 = vpack.c.b16 %v277, %v276
        %v310 = vunpack.c.l.b16 %v223
        %v311 = vunpack.c.l.b16 %v224
        %v312 = vunpack.c.l.b16 %v225
        %v313 = vunpack.c.l.b16 %v226
        %v314 = vunpack.c.l.b16 %v227
        %v315 = vunpack.c.l.b16 %v228
        %v316 = vunpack.c.l.b16 %v229
        %v317 = vunpack.c.l.b16 %v230
        %v318 = vunpack.c.l.b16 %v231
        %v319 = vunpack.c.l.b16 %v232
        %v320 = vunpack.c.l.b16 %v233
        %v321 = vunpack.c.l.b16 %v234
        %v322 = vunpack.c.l.b16 %v235
        %v323 = vunpack.c.l.b16 %v236
        %v324 = vunpack.c.l.b16 %v237
        %v325 = vunpack.c.l.b16 %v238
        %v326 = vpack.c.b16 %v311, %v310
        %v327 = vpack.c.b16 %v313, %v312
        %v328 = vpack.c.b16 %v315, %v314
        %v329 = vpack.c.b16 %v317, %v316
        %v330 = vpack.c.b16 %v319, %v318
        %v331 = vpack.c.b16 %v321, %v320
        %v332 = vpack.c.b16 %v323, %v322
        %v333 = vpack.c.b16 %v325, %v324
        %342 = vmatprep.subr.bf16.mxu0 0
        %343 = vmatpush1.bf16.msra.mxu0 %v333
        %344 = vmatprep.subr.bf16.mxu0 0
        %345 = vmatpush1.bf16.msra.mxu0 %v332
        %346 = vmatprep.subr.bf16.mxu0 0
        %347 = vmatpush1.bf16.msra.mxu0 %v331
        %348 = vmatprep.subr.bf16.mxu0 0
        %349 = vmatpush1.bf16.msra.mxu0 %v330
        %350 = vmatprep.subr.bf16.mxu0 0
        %351 = vmatpush1.bf16.msra.mxu0 %v329
        %352 = vmatprep.subr.bf16.mxu0 0
        %353 = vmatpush1.bf16.msra.mxu0 %v328
        %354 = vmatprep.subr.bf16.mxu0 0
        %355 = vmatpush1.bf16.msra.mxu0 %v327
        %356 = vmatprep.subr.bf16.mxu0 0
        %357 = vmatpush1.bf16.msra.mxu0 %v326
        %358 = vmatprep.subr.bf16.mxu0 0
        %359 = vmatpush2.bf16.msra.mxu0 0
        %360 = vmatprep.subr.bf16.mxu0 0
        %361 = vmatpush2.bf16.msra.mxu0 0
        %362 = vmatprep.subr.bf16.mxu0 0
        %363 = vmatpush2.bf16.msra.mxu0 0
        %364 = vmatprep.subr.bf16.mxu0 0
        %365 = vmatpush2.bf16.msra.mxu0 0
        %366 = vmatprep.subr.bf16.mxu0 0
        %367 = vmatpush2.bf16.msra.mxu0 0
        %368 = vmatprep.subr.bf16.mxu0 0
        %369 = vmatpush2.bf16.msra.mxu0 0
        %370 = vmatprep.subr.bf16.mxu0 0
        %371 = vmatpush2.bf16.msra.mxu0 0
        %372 = vmatprep.subr.bf16.mxu0 0
        %373 = vmatpush2.bf16.msra.mxu0 0
        %374 = vmatprep.mubr.bf16.mxu0 0
        %375 = vmatmul.mubr.bf16.gmra.mxu0 %v278
        %v376 = vpop.f32.mrf.mxu0
        %v377 = vadd.f32 %v244, %v376
        %v378 = vpop.f32.mrf.mxu0
        %v379 = vpop.f32.mrf.mxu0
        %v380 = vadd.f32 %v244, %v379
        %v381 = vpop.f32.mrf.mxu0
        %382 = vmatprep.mubr.bf16.mxu0 0
        %383 = vmatmul.mubr.bf16.gmra.mxu0 %v279
        %v384 = vpop.f32.mrf.mxu0
        %v385 = vadd.f32 %v244, %v384
        %v386 = vpop.f32.mrf.mxu0
        %v387 = vpop.f32.mrf.mxu0
        %v388 = vadd.f32 %v244, %v387
        %v389 = vpop.f32.mrf.mxu0
        %390 = vmatprep.mubr.bf16.mxu0 0
        %391 = vmatmul.mubr.bf16.gmra.mxu0 %v280
        %v392 = vpop.f32.mrf.mxu0
        %v393 = vadd.f32 %v244, %v392
        %v394 = vpop.f32.mrf.mxu0
        %v395 = vpop.f32.mrf.mxu0
        %v396 = vadd.f32 %v244, %v395
        %v397 = vpop.f32.mrf.mxu0
        %398 = vmatprep.mubr.bf16.mxu0 0
        %399 = vmatmul.mubr.bf16.gmra.mxu0 %v281
        %v400 = vpop.f32.mrf.mxu0
        %v401 = vadd.f32 %v244, %v400
        %v402 = vpop.f32.mrf.mxu0
        %v403 = vpop.f32.mrf.mxu0
        %v404 = vadd.f32 %v244, %v403
        %v405 = vpop.f32.mrf.mxu0
        %406 = vmatprep.mubr.bf16.mxu0 0
        %407 = vmatmul.mubr.bf16.gmra.mxu0 %v282
        %v408 = vpop.f32.mrf.mxu0
        %v409 = vadd.f32 %v244, %v408
        %v410 = vpop.f32.mrf.mxu0
        %v411 = vpop.f32.mrf.mxu0
        %v412 = vadd.f32 %v244, %v411
        %v413 = vpop.f32.mrf.mxu0
        %414 = vmatprep.mubr.bf16.mxu0 0
        %415 = vmatmul.mubr.bf16.gmra.mxu0 %v283
        %v416 = vpop.f32.mrf.mxu0
        %v417 = vadd.f32 %v244, %v416
        %v418 = vpop.f32.mrf.mxu0
        %v419 = vpop.f32.mrf.mxu0
        %v420 = vadd.f32 %v244, %v419
        %v421 = vpop.f32.mrf.mxu0
        %422 = vmatprep.mubr.bf16.mxu0 0
        %423 = vmatmul.mubr.bf16.gmra.mxu0 %v284
        %v424 = vpop.f32.mrf.mxu0
        %v425 = vadd.f32 %v244, %v424
        %v426 = vpop.f32.mrf.mxu0
        %v427 = vpop.f32.mrf.mxu0
        %v428 = vadd.f32 %v244, %v427
        %v429 = vpop.f32.mrf.mxu0
        %430 = vmatprep.mubr.bf16.mxu0 0
        %431 = vmatmul.mubr.bf16.gmra.mxu0 %v285
        %v432 = vpop.f32.mrf.mxu0
        %v433 = vadd.f32 %v244, %v432
        %v434 = vpop.f32.mrf.mxu0
        %v435 = vpop.f32.mrf.mxu0
        %v436 = vadd.f32 %v244, %v435
        %v437 = vpop.f32.mrf.mxu0
        %438 = vdwg.mxu0
        %v439 = vpack.c.bf16 %v380, %v377
        %v440 = vpack.c.bf16 %v388, %v385
        %v441 = vpack.c.bf16 %v396, %v393
        %v442 = vpack.c.bf16 %v404, %v401
        %v443 = vpack.c.bf16 %v412, %v409
        %v444 = vpack.c.bf16 %v420, %v417
        %v445 = vpack.c.bf16 %v428, %v425
        %v446 = vpack.c.bf16 %v436, %v433
        %v455 = vunpack.c.l.b16 %v439
        %v456 = vunpack.c.h.b16 %v439
        %v457 = vunpack.c.l.b16 %v440
        %v458 = vunpack.c.h.b16 %v440
        %v459 = vunpack.c.l.b16 %v441
        %v460 = vunpack.c.h.b16 %v441
        %v461 = vunpack.c.l.b16 %v442
        %v462 = vunpack.c.h.b16 %v442
        %v463 = vunpack.c.l.b16 %v443
        %v464 = vunpack.c.h.b16 %v443
        %v465 = vunpack.c.l.b16 %v444
        %v466 = vunpack.c.h.b16 %v444
        %v467 = vunpack.c.l.b16 %v445
        %v468 = vunpack.c.h.b16 %v445
        %v469 = vunpack.c.l.b16 %v446
        %v470 = vunpack.c.h.b16 %v446
        %v471 = vpack.c.b16 %v455, %v455
        %v472 = vpack.c.b16 %v456, %v456
        %v473 = vpack.c.b16 %v457, %v457
        %v474 = vpack.c.b16 %v458, %v458
        %v475 = vpack.c.b16 %v459, %v459
        %v476 = vpack.c.b16 %v460, %v460
        %v477 = vpack.c.b16 %v461, %v461
        %v478 = vpack.c.b16 %v462, %v462
        %v479 = vpack.c.b16 %v463, %v463
        %v480 = vpack.c.b16 %v464, %v464
        %v481 = vpack.c.b16 %v465, %v465
        %v482 = vpack.c.b16 %v466, %v466
        %v483 = vpack.c.b16 %v467, %v467
        %v484 = vpack.c.b16 %v468, %v468
        %v485 = vpack.c.b16 %v469, %v469
        %v486 = vpack.c.b16 %v470, %v470
        %503 = vst [vmem:[%s203] sm:$0xf] %v471
        %504 = vst [vmem:[%s203 + $0x4] sm:$0xf] %v472
        %505 = vst [vmem:[%s203 + $0x8] sm:$0xf] %v473
        %506 = vst [vmem:[%s203 + $0xc] sm:$0xf] %v474
        %507 = vst [vmem:[%s203 + $0x10] sm:$0xf] %v475
        %508 = vst [vmem:[%s203 + $0x14] sm:$0xf] %v476
        %509 = vst [vmem:[%s203 + $0x18] sm:$0xf] %v477
        %510 = vst [vmem:[%s203 + $0x1c] sm:$0xf] %v478
        %511 = vst [vmem:[%s203 + $0x20] sm:$0xf] %v479
        %512 = vst [vmem:[%s203 + $0x24] sm:$0xf] %v480
        %513 = vst [vmem:[%s203 + $0x28] sm:$0xf] %v481
        %514 = vst [vmem:[%s203 + $0x2c] sm:$0xf] %v482
        %515 = vst [vmem:[%s203 + $0x30] sm:$0xf] %v483
        %516 = vst [vmem:[%s203 + $0x34] sm:$0xf] %v484
        %517 = vst [vmem:[%s203 + $0x38] sm:$0xf] %v485
        %518 = vst [vmem:[%s203 + $0x3c] sm:$0xf] %v486
        %s519 = sand.u32 %s97, 1
        %s520 = scalar_lea.sflag [#allocation4], %s519
        %s521 = sand.u32 %s97, 1
        %s522 = smul.addr %s521, 64
        %s523 = scalar_lea.vmem [#allocation7], %s522
        // Predicated region
        $region41: #{tpu_custom_call.1} parent=31 // pred_check
          %p524 = pneg %p107
        $region42: #{tpu_custom_call.1} parent=31 // pred_check_branch
          %526 = sbr.rel (%p524) target = $region44
        $region43: #{tpu_custom_call.1} parent=31 // pred_region
          %s527 = smul.u32 16, %s21
          %s529 = ssub.s32 1024, 1024
          %530 = vsyncadd %s520, %s529
          %s531 = smul.addr %s527, 64
          %s532 = scalar_lea.hbm %s3, %s531
          %s533 = sshll.u32 %s523, 4
          %s534 = int_to_ptr.vmem [resolvable:$true] %s533
          %539 = dma.vmem_to_hbm [thread:$0]  %s534, 1024, %s532, %s520, 64, 64, 4
        $region44: #{tpu_custom_call.1} parent=31 // pred_fallthru
          _
      $region32: #{tpu_custom_call.1} parent=5 // pred_fallthru
        _
      %p540 = scmp.le.s32.totalorder 2, %s16
      // Predicated region
      $region45: #{tpu_custom_call.1} parent=5 // pred_check
        %p541 = pneg %p540
      $region46: #{tpu_custom_call.1} parent=5 // pred_check_branch
        %543 = sbr.rel (%p541) target = $region48
      $region47: #{tpu_custom_call.1} parent=5 // pred_region
        %s544 = ssub.s32 %s16, 2
        // Predicated region
        $region49: #{tpu_custom_call.1} parent=47 // pred_check
          %p545 = pneg %p113
        $region50: #{tpu_custom_call.1} parent=47 // pred_check_branch
          %547 = sbr.rel (%p545) target = $region52
        $region51: #{tpu_custom_call.1} parent=47 // pred_region
          %s548 = sand.u32 %s98, 1
          %s549 = scalar_lea.sflag [#allocation4], %s548
          %s550 = sand.u32 %s98, 1
          %s551 = smul.addr %s550, 64
          %s552 = scalar_lea.vmem [#allocation7], %s551
          %553 = dma.done %s549, 1024
        $region52: #{tpu_custom_call.1} parent=47 // pred_fallthru
          _
      $region48: #{tpu_custom_call.1} parent=5 // pred_fallthru
        _
    $region6: #{tpu_custom_call.1} parent=1 // loop_footer
      %s20 = sadd.s32 1, %s16
    $region7: #{tpu_custom_call.1} parent=1 // loop_footer_branch
      %15 = sbr.rel target = $region3
    $region8: #{tpu_custom_call.1} parent=1 // loop_exit
      _
    %554 = vsyncpa [#allocation3], 1
    %s555 = scalar_lea.sflag [#allocation3], 1
    %556 = vsyncpa %s555, 1
    %557 = vsyncpa [#allocation6], 1
    %558 = vsyncpa [#allocation4], 1
    %s559 = scalar_lea.sflag [#allocation4], 1
    %560 = vsyncpa %s559, 1

</llo_original>
